<compile_context>
chip_gen: v6e
topology: v6e:2x2x1
jax: 0.10.0
libtpu: 0.0.40
codegen_flags: <defaults>
</compile_context>

<pallas_src>
import jax
import jax.numpy as jnp
from jax.experimental import pallas as pl
from jax.experimental.pallas import tpu as pltpu


def _round_up(x, m):
    return ((x + m - 1) // m) * m


def _pad2d(a, rows, cols):
    a = jnp.asarray(a, jnp.float32)
    return jnp.pad(a, ((0, rows - a.shape[0]), (0, cols - a.shape[1])))


def _prep_params(params_mu, params_lv, compute_dtype):
    """Pad all dims to 128-lane multiples; fuse only layer 0 (shared input).

    Returns (w0_fused, b0_fused, deep, dims, dims_pad) where `deep` is a flat
    list [w_mu_1, b_mu_1, w_lv_1, b_lv_1, ...].  Padded weight rows/cols and
    padded bias entries are zero, so all valid outputs are exact.
    """
    n_linear = len(params_mu)
    dims = [int(params_mu[0][0].shape[0])] + [int(w.shape[1]) for (w, _) in params_mu]
    dims_pad = [_round_up(d, 128) for d in dims]

    # layer 0: both nets consume the same x -> concatenate along the output axis
    (w0m, b0m), (w0l, b0l) = params_mu[0], params_lv[0]
    w0 = jnp.concatenate(
        [_pad2d(w0m, dims_pad[0], dims_pad[1]),
         _pad2d(w0l, dims_pad[0], dims_pad[1])], axis=1).astype(compute_dtype)
    b0 = jnp.concatenate(
        [_pad2d(jnp.asarray(b0m)[None, :], 1, dims_pad[1]),
         _pad2d(jnp.asarray(b0l)[None, :], 1, dims_pad[1])], axis=1)

    # deeper layers stay separate (no block-diag zeros on the MXU)
    deep = []
    for i in range(1, n_linear):
        for (w, b) in (params_mu[i], params_lv[i]):
            deep.append(_pad2d(w, dims_pad[i], dims_pad[i + 1]).astype(compute_dtype))
            deep.append(_pad2d(jnp.asarray(b)[None, :], 1, dims_pad[i + 1]))
    return w0, b0, deep, dims, dims_pad


def _make_kernel(n_deep, h0_half_pad, n_latent_pad, activation, compute_dtype):
    """Kernel over one batch tile: fused layer 0 -> two MLP tails -> reparam."""

    def kernel(*refs):
        x_ref, w0_ref, b0_ref = refs[0], refs[1], refs[2]
        deep = refs[3:3 + 4 * n_deep]
        eps_ref = refs[3 + 4 * n_deep]
        out_ref = refs[4 + 4 * n_deep]

        x = x_ref[...].astype(compute_dtype)
        h = jnp.dot(x, w0_ref[...], preferred_element_type=jnp.float32) + b0_ref[...]

        if n_deep > 0:
            h = activation(h)
            h_mu = h[:, :h0_half_pad]            # 128-aligned static slice
            h_lv = h[:, h0_half_pad:]
            for i in range(n_deep):
                w_mu, b_mu, w_lv, b_lv = deep[4 * i:4 * i + 4]
                h_mu = jnp.dot(h_mu.astype(compute_dtype), w_mu[...],
                               preferred_element_type=jnp.float32) + b_mu[...]
                h_lv = jnp.dot(h_lv.astype(compute_dtype), w_lv[...],
                               preferred_element_type=jnp.float32) + b_lv[...]
                if i < n_deep - 1:               # FCNet: activation on hidden layers only
                    h_mu = activation(h_mu)
                    h_lv = activation(h_lv)
            mu, log_var = h_mu, h_lv
        else:
            mu = h[:, :n_latent_pad]
            log_var = h[:, n_latent_pad:]

        std = jnp.exp(0.5 * log_var)
        beta = mu + std * eps_ref[...]

        # single lane-dense full-block store: [beta | mu | log_var]
        out_ref[...] = jnp.concatenate([beta, mu, log_var], axis=1)

    return kernel


def encoder_fcnet_vae(x, params_mu, params_lv, eps, activation=jnp.tanh,
                      compute_dtype=jnp.bfloat16, block_batch=512):
    """Forward pass of EncoderFCNet_VAE.

    x          : (B, my*mx, in_size)
    params_mu  : list of (W, b) with W: (d_in, d_out), b: (d_out,)
    params_lv  : same structure as params_mu
    eps        : (B, n_latent) standard-normal noise (torch.randn_like)
    returns    : (beta, mu, log_var), each (B, n_latent) float32
    """
    B = int(x.shape[0])
    x_flat = x.reshape(B, -1).astype(jnp.float32)
    D = int(x_flat.shape[1])

    w0, b0, deep, dims, dims_pad = _prep_params(params_mu, params_lv, compute_dtype)
    n_linear = len(params_mu)
    n_deep = n_linear - 1
    n_latent = dims[-1]
    D_pad, H1_pad, L_pad = dims_pad[0], dims_pad[1], dims_pad[-1]

    # ---- batch tiling: TB rows per grid step (multiple of 8) ----
    TB = max(8, (min(int(block_batch), _round_up(B, 8)) // 8) * 8)
    if B >= 16:                       # >= 2 parallel steps keeps both v7x TCs busy
        TB = min(TB, _round_up((B + 1) // 2, 8))
    B_pad = _round_up(B, TB)
    grid = (B_pad // TB,)

    x_p = jnp.pad(x_flat, ((0, B_pad - B), (0, D_pad - D)))
    eps_p = jnp.pad(eps.astype(jnp.float32),
                    ((0, B_pad - B), (0, L_pad - n_latent)))

    operands = [x_p, w0, b0, *deep, eps_p]

    # ---- VMEM budget (explicit: v5e scoped default is only 16 MiB) ----
    resident_bytes = sum(int(o.size) * int(o.dtype.itemsize) for o in [w0, b0] + deep)
    streamed_bytes = (TB * D_pad + TB * L_pad + TB * 3 * L_pad) * 4
    scratch_bytes = TB * (2 * H1_pad + 2 * max(dims_pad[1:])) * 4
    needed = 2 * streamed_bytes + 2 * resident_bytes + scratch_bytes
    vmem_limit = int(min(max(2 * needed, 32 << 20), 64 << 20))

    # ---- advisory cost estimate: real FLOPs only, HBM bytes once ----
    mm_flops = 2 * B * 2 * sum(dims[i] * dims[i + 1] for i in range(n_linear))
    transcendentals = B * (2 * sum(dims[1:-1]) + n_latent)
    bytes_accessed = (resident_bytes + B * D * 4 + B * n_latent * 4
                      + B * 3 * n_latent * 4)
    cost = pl.CostEstimate(flops=int(mm_flops),
                           transcendentals=int(transcendentals),
                           bytes_accessed=int(bytes_accessed))

    kernel = _make_kernel(n_deep, H1_pad, L_pad, activation, compute_dtype)
    out_shape = jax.ShapeDtypeStruct((B_pad, 3 * L_pad), jnp.float32)
    out_spec = pl.BlockSpec((TB, 3 * L_pad), lambda i: (i, 0))

    def batch_spec(cols):
        return pl.BlockSpec((TB, cols), lambda i: (i, 0))

    def resident_spec(shape, single_buffered):
        idx = lambda i: (0,) * len(shape)
        if single_buffered:
            try:  # pl.Buffered / pipeline_mode may be missing on older jax
                return pl.BlockSpec(shape, idx, pipeline_mode=pl.Buffered(1))
            except Exception:
                pass
        return pl.BlockSpec(shape, idx)

    def _call(single_buffered_weights):
        in_specs = ([batch_spec(D_pad),
                     resident_spec(tuple(w0.shape), single_buffered_weights),
                     resident_spec(tuple(b0.shape), single_buffered_weights)]
                    + [resident_spec(tuple(o.shape), single_buffered_weights)
                       for o in deep]
                    + [batch_spec(L_pad)])
        return pl.pallas_call(
            kernel,
            out_shape=out_shape,
            grid=grid,
            in_specs=in_specs,
            out_specs=out_spec,
            compiler_params=pltpu.CompilerParams(
                dimension_semantics=("parallel",),
                vmem_limit_bytes=vmem_limit),
            cost_estimate=cost,
        )(*operands)

    try:
        out = _call(True)     # single-buffered resident weights (v7x VMEM win)
    except Exception:         # fall back to default double buffering
        out = _call(False)

    beta = out[:B, 0:n_latent]
    mu = out[:B, L_pad:L_pad + n_latent]
    log_var = out[:B, 2 * L_pad:2 * L_pad + n_latent]
    return beta, mu, log_var


def _init_fcnet_params(key, layers_list):
    """Deterministic synthetic init mimicking nn.Linear fan-in scaling."""
    params = []
    for d_in, d_out in zip(layers_list[:-1], layers_list[1:]):
        key, kw, kb = jax.random.split(key, 3)
        bound = 1.0 / float(d_in) ** 0.5
        w = jax.random.uniform(kw, (d_in, d_out), jnp.float32, -bound, bound)
        b = jax.random.uniform(kb, (d_out,), jnp.float32, -bound, bound)
        params.append((w, b))
    return params, key


if __name__ == "__main__":
    key = jax.random.PRNGKey(0)

    # small shapes consistent with the module's forward contract
    B, my_mx, in_size = 2, 16, 4
    n_hidden, n_latent = 32, 8
    layers_list = [my_mx * in_size, n_hidden, n_latent]   # FCNet layer widths

    key, kx, keps = jax.random.split(key, 3)
    x = jax.random.normal(kx, (B, my_mx, in_size), jnp.float32)
    eps = jax.random.normal(keps, (B, n_latent), jnp.float32)  # randn_like(log_var)

    params_mu, key = _init_fcnet_params(key, layers_list)
    params_lv, key = _init_fcnet_params(key, layers_list)

    # pure-JAX reference (unfused nets, full-precision matmuls)
    def ref_mlp(xf, params):
        h = xf
        for i, (w, b) in enumerate(params):
            h = jnp.dot(h, w, precision=jax.lax.Precision.HIGHEST) + b
            if i < len(params) - 1:
                h = jnp.tanh(h)
        return h

    xf = x.reshape(B, -1)
    mu_ref = ref_mlp(xf, params_mu)
    lv_ref = ref_mlp(xf, params_lv)
    beta_ref = mu_ref + jnp.exp(0.5 * lv_ref) * eps

    # exact f32 path (tight tolerance)
    beta32, mu32, lv32 = encoder_fcnet_vae(x, params_mu, params_lv, eps,
                                           activation=jnp.tanh,
                                           compute_dtype=jnp.float32)
    jax.block_until_ready((beta32, mu32, lv32))
    assert jnp.allclose(mu32, mu_ref, atol=1e-4, rtol=1e-4)
    assert jnp.allclose(lv32, lv_ref, atol=1e-4, rtol=1e-4)
    assert jnp.allclose(beta32, beta_ref, atol=1e-4, rtol=1e-4)

    # default bf16-in / f32-accumulate path (throughput mode)
    beta, mu, log_var = encoder_fcnet_vae(x, params_mu, params_lv, eps,
                                          activation=jnp.tanh)
    jax.block_until_ready((beta, mu, log_var))
    assert float(jnp.max(jnp.abs(mu - mu_ref))) < 3e-2
    assert float(jnp.max(jnp.abs(log_var - lv_ref))) < 3e-2
    assert float(jnp.max(jnp.abs(beta - beta_ref))) < 3e-2

    print("KERNEL_OK")
</pallas_src>

<mosaic_0001>
module attributes {stable_mosaic.version = 11 : i64} {
  func.func @kernel(%arg0: i32, %arg1: memref<8x128xf32, #tpu.memory_space<vmem>>, %arg2: memref<128x256xf32, #tpu.memory_space<vmem>>, %arg3: memref<1x256xf32, #tpu.memory_space<vmem>>, %arg4: memref<128x128xf32, #tpu.memory_space<vmem>>, %arg5: memref<1x128xf32, #tpu.memory_space<vmem>>, %arg6: memref<128x128xf32, #tpu.memory_space<vmem>>, %arg7: memref<1x128xf32, #tpu.memory_space<vmem>>, %arg8: memref<8x128xf32, #tpu.memory_space<vmem>>, %arg9: memref<8x384xf32, #tpu.memory_space<vmem>>) attributes {dimension_semantics = [#tpu.dimension_semantics<parallel>], iteration_bounds = array<i64: 1>, scalar_prefetch = 0 : i64, scratch_operands = 0 : i64, tpu.core_type = #tpu.core_type<tc>, window_params = [{transform_indices = @transform_0, window_bounds = array<i64: 8, 128>}, {pipeline_mode = #tpu.pipeline_mode<synchronous>, transform_indices = @transform_1, window_bounds = array<i64: 128, 256>}, {pipeline_mode = #tpu.pipeline_mode<synchronous>, transform_indices = @transform_2, window_bounds = array<i64: 1, 256>}, {pipeline_mode = #tpu.pipeline_mode<synchronous>, transform_indices = @transform_3, window_bounds = array<i64: 128, 128>}, {pipeline_mode = #tpu.pipeline_mode<synchronous>, transform_indices = @transform_4, window_bounds = array<i64: 1, 128>}, {pipeline_mode = #tpu.pipeline_mode<synchronous>, transform_indices = @transform_5, window_bounds = array<i64: 128, 128>}, {pipeline_mode = #tpu.pipeline_mode<synchronous>, transform_indices = @transform_6, window_bounds = array<i64: 1, 128>}, {transform_indices = @transform_7, window_bounds = array<i64: 8, 128>}, {transform_indices = @transform_8, window_bounds = array<i64: 8, 384>}]} {
    %c0 = arith.constant 0 : index
    %c0_0 = arith.constant 0 : index
    %0 = vector.load %arg1[%c0, %c0_0] : memref<8x128xf32, #tpu.memory_space<vmem>>, vector<8x128xf32>
    %c0_1 = arith.constant 0 : index
    %c0_2 = arith.constant 0 : index
    %1 = vector.load %arg2[%c0_1, %c0_2] : memref<128x256xf32, #tpu.memory_space<vmem>>, vector<128x256xf32>
    %cst = arith.constant dense<0.000000e+00> : vector<8x256xf32>
    %2 = tpu.matmul %0, %1, %cst {dimension_numbers = #tpu.dot_dimension_numbers<[1], [0], [0], [1], [0, 0, 1, 1], [], []>} : vector<8x128xf32>, vector<128x256xf32>, vector<8x256xf32> -> vector<8x256xf32>
    %c0_3 = arith.constant 0 : index
    %c0_4 = arith.constant 0 : index
    %3 = vector.load %arg3[%c0_3, %c0_4] : memref<1x256xf32, #tpu.memory_space<vmem>>, vector<1x256xf32>
    %4 = vector.broadcast %3 : vector<1x256xf32> to vector<8x256xf32>
    %5 = arith.addf %2, %4 : vector<8x256xf32>
    %6 = math.tanh %5 : vector<8x256xf32>
    %7 = vector.extract_strided_slice %6 {offsets = [0, 0], sizes = [8, 128], strides = [1, 1]} : vector<8x256xf32> to vector<8x128xf32>
    %8 = vector.extract_strided_slice %6 {offsets = [0, 128], sizes = [8, 128], strides = [1, 1]} : vector<8x256xf32> to vector<8x128xf32>
    %c0_5 = arith.constant 0 : index
    %c0_6 = arith.constant 0 : index
    %9 = vector.load %arg4[%c0_5, %c0_6] : memref<128x128xf32, #tpu.memory_space<vmem>>, vector<128x128xf32>
    %cst_7 = arith.constant dense<0.000000e+00> : vector<8x128xf32>
    %10 = tpu.matmul %7, %9, %cst_7 {dimension_numbers = #tpu.dot_dimension_numbers<[1], [0], [0], [1], [0, 0, 1, 1], [], []>} : vector<8x128xf32>, vector<128x128xf32>, vector<8x128xf32> -> vector<8x128xf32>
    %c0_8 = arith.constant 0 : index
    %c0_9 = arith.constant 0 : index
    %11 = vector.load %arg5[%c0_8, %c0_9] : memref<1x128xf32, #tpu.memory_space<vmem>>, vector<1x128xf32>
    %12 = vector.broadcast %11 : vector<1x128xf32> to vector<8x128xf32>
    %13 = arith.addf %10, %12 : vector<8x128xf32>
    %c0_10 = arith.constant 0 : index
    %c0_11 = arith.constant 0 : index
    %14 = vector.load %arg6[%c0_10, %c0_11] : memref<128x128xf32, #tpu.memory_space<vmem>>, vector<128x128xf32>
    %cst_12 = arith.constant dense<0.000000e+00> : vector<8x128xf32>
    %15 = tpu.matmul %8, %14, %cst_12 {dimension_numbers = #tpu.dot_dimension_numbers<[1], [0], [0], [1], [0, 0, 1, 1], [], []>} : vector<8x128xf32>, vector<128x128xf32>, vector<8x128xf32> -> vector<8x128xf32>
    %c0_13 = arith.constant 0 : index
    %c0_14 = arith.constant 0 : index
    %16 = vector.load %arg7[%c0_13, %c0_14] : memref<1x128xf32, #tpu.memory_space<vmem>>, vector<1x128xf32>
    %17 = vector.broadcast %16 : vector<1x128xf32> to vector<8x128xf32>
    %18 = arith.addf %15, %17 : vector<8x128xf32>
    %cst_15 = arith.constant 5.000000e-01 : f32
    %19 = vector.broadcast %cst_15 : f32 to vector<8x128xf32>
    %20 = arith.mulf %19, %18 : vector<8x128xf32>
    %21 = math.exp %20 : vector<8x128xf32>
    %c0_16 = arith.constant 0 : index
    %c0_17 = arith.constant 0 : index
    %22 = vector.load %arg8[%c0_16, %c0_17] : memref<8x128xf32, #tpu.memory_space<vmem>>, vector<8x128xf32>
    %23 = arith.mulf %21, %22 : vector<8x128xf32>
    %24 = arith.addf %13, %23 : vector<8x128xf32>
    %25 = tpu.concatenate %24, %13, %18 in 1 : vector<8x128xf32>, vector<8x128xf32>, vector<8x128xf32> -> vector<8x384xf32>
    %c0_18 = arith.constant 0 : index
    %c0_19 = arith.constant 0 : index
    %26 = vector.load %arg9[%c0_18, %c0_19] : memref<8x384xf32, #tpu.memory_space<vmem>>, vector<8x384xf32>
    tpu.vector_store %arg9[%c0_18, %c0_19], %25 {strides = array<i32>} : memref<8x384xf32, #tpu.memory_space<vmem>>, vector<8x384xf32>,
    return
  }
  func.func @transform_0(%arg0: i32) -> (i32, i32) {
    %c0_i32 = arith.constant 0 : i32
    %c0_i32_0 = arith.constant 0 : i32
    return %arg0, %c0_i32 : i32, i32
  }
  func.func @transform_1(%arg0: i32) -> (i32, i32) {
    %c0_i32 = arith.constant 0 : i32
    %c0_i32_0 = arith.constant 0 : i32
    %c0_i32_1 = arith.constant 0 : i32
    return %c0_i32, %c0_i32_0 : i32, i32
  }
  func.func @transform_2(%arg0: i32) -> (i32, i32) {
    %c0_i32 = arith.constant 0 : i32
    %c0_i32_0 = arith.constant 0 : i32
    %c0_i32_1 = arith.constant 0 : i32
    return %c0_i32, %c0_i32_0 : i32, i32
  }
  func.func @transform_3(%arg0: i32) -> (i32, i32) {
    %c0_i32 = arith.constant 0 : i32
    %c0_i32_0 = arith.constant 0 : i32
    %c0_i32_1 = arith.constant 0 : i32
    return %c0_i32, %c0_i32_0 : i32, i32
  }
  func.func @transform_4(%arg0: i32) -> (i32, i32) {
    %c0_i32 = arith.constant 0 : i32
    %c0_i32_0 = arith.constant 0 : i32
    %c0_i32_1 = arith.constant 0 : i32
    return %c0_i32, %c0_i32_0 : i32, i32
  }
  func.func @transform_5(%arg0: i32) -> (i32, i32) {
    %c0_i32 = arith.constant 0 : i32
    %c0_i32_0 = arith.constant 0 : i32
    %c0_i32_1 = arith.constant 0 : i32
    return %c0_i32, %c0_i32_0 : i32, i32
  }
  func.func @transform_6(%arg0: i32) -> (i32, i32) {
    %c0_i32 = arith.constant 0 : i32
    %c0_i32_0 = arith.constant 0 : i32
    %c0_i32_1 = arith.constant 0 : i32
    return %c0_i32, %c0_i32_0 : i32, i32
  }
  func.func @transform_7(%arg0: i32) -> (i32, i32) {
    %c0_i32 = arith.constant 0 : i32
    %c0_i32_0 = arith.constant 0 : i32
    return %arg0, %c0_i32 : i32, i32
  }
  func.func @transform_8(%arg0: i32) -> (i32, i32) {
    %c0_i32 = arith.constant 0 : i32
    %c0_i32_0 = arith.constant 0 : i32
    return %arg0, %c0_i32 : i32, i32
  }
}

module attributes {stable_mosaic.version = 11 : i64} {
  func.func @kernel(%arg0: i32, %arg1: memref<8x128xf32, #tpu.memory_space<vmem>>, %arg2: memref<128x256xf32, #tpu.memory_space<vmem>>, %arg3: memref<1x256xf32, #tpu.memory_space<vmem>>, %arg4: memref<128x128xf32, #tpu.memory_space<vmem>>, %arg5: memref<1x128xf32, #tpu.memory_space<vmem>>, %arg6: memref<128x128xf32, #tpu.memory_space<vmem>>, %arg7: memref<1x128xf32, #tpu.memory_space<vmem>>, %arg8: memref<8x128xf32, #tpu.memory_space<vmem>>, %arg9: memref<8x384xf32, #tpu.memory_space<vmem>>) attributes {dimension_semantics = [#tpu.dimension_semantics<parallel>], iteration_bounds = array<i64: 1>, scalar_prefetch = 0 : i64, scratch_operands = 0 : i64, tpu.core_type = #tpu.core_type<tc>, window_params = [{transform_indices = @transform_0, window_bounds = array<i64: 8, 128>}, {pipeline_mode = #tpu.pipeline_mode<synchronous>, transform_indices = @transform_1, window_bounds = array<i64: 128, 256>}, {pipeline_mode = #tpu.pipeline_mode<synchronous>, transform_indices = @transform_2, window_bounds = array<i64: 1, 256>}, {pipeline_mode = #tpu.pipeline_mode<synchronous>, transform_indices = @transform_3, window_bounds = array<i64: 128, 128>}, {pipeline_mode = #tpu.pipeline_mode<synchronous>, transform_indices = @transform_4, window_bounds = array<i64: 1, 128>}, {pipeline_mode = #tpu.pipeline_mode<synchronous>, transform_indices = @transform_5, window_bounds = array<i64: 128, 128>}, {pipeline_mode = #tpu.pipeline_mode<synchronous>, transform_indices = @transform_6, window_bounds = array<i64: 1, 128>}, {transform_indices = @transform_7, window_bounds = array<i64: 8, 128>}, {transform_indices = @transform_8, window_bounds = array<i64: 8, 384>}]} {
    %c0 = arith.constant 0 : index
    %c0_0 = arith.constant 0 : index
    %0 = vector.load %arg1[%c0, %c0_0] : memref<8x128xf32, #tpu.memory_space<vmem>>, vector<8x128xf32>
    %c0_1 = arith.constant 0 : index
    %c0_2 = arith.constant 0 : index
    %1 = vector.load %arg2[%c0_1, %c0_2] : memref<128x256xf32, #tpu.memory_space<vmem>>, vector<128x256xf32>
    %cst = arith.constant dense<0.000000e+00> : vector<8x256xf32>
    %2 = tpu.matmul %0, %1, %cst {dimension_numbers = #tpu.dot_dimension_numbers<[1], [0], [0], [1], [0, 0, 1, 1], [], []>} : vector<8x128xf32>, vector<128x256xf32>, vector<8x256xf32> -> vector<8x256xf32>
    %c0_3 = arith.constant 0 : index
    %c0_4 = arith.constant 0 : index
    %3 = vector.load %arg3[%c0_3, %c0_4] : memref<1x256xf32, #tpu.memory_space<vmem>>, vector<1x256xf32>
    %4 = vector.broadcast %3 : vector<1x256xf32> to vector<8x256xf32>
    %5 = arith.addf %2, %4 : vector<8x256xf32>
    %6 = math.tanh %5 : vector<8x256xf32>
    %7 = vector.extract_strided_slice %6 {offsets = [0, 0], sizes = [8, 128], strides = [1, 1]} : vector<8x256xf32> to vector<8x128xf32>
    %8 = vector.extract_strided_slice %6 {offsets = [0, 128], sizes = [8, 128], strides = [1, 1]} : vector<8x256xf32> to vector<8x128xf32>
    %c0_5 = arith.constant 0 : index
    %c0_6 = arith.constant 0 : index
    %9 = vector.load %arg4[%c0_5, %c0_6] : memref<128x128xf32, #tpu.memory_space<vmem>>, vector<128x128xf32>
    %cst_7 = arith.constant dense<0.000000e+00> : vector<8x128xf32>
    %10 = tpu.matmul %7, %9, %cst_7 {dimension_numbers = #tpu.dot_dimension_numbers<[1], [0], [0], [1], [0, 0, 1, 1], [], []>} : vector<8x128xf32>, vector<128x128xf32>, vector<8x128xf32> -> vector<8x128xf32>
    %c0_8 = arith.constant 0 : index
    %c0_9 = arith.constant 0 : index
    %11 = vector.load %arg5[%c0_8, %c0_9] : memref<1x128xf32, #tpu.memory_space<vmem>>, vector<1x128xf32>
    %12 = vector.broadcast %11 : vector<1x128xf32> to vector<8x128xf32>
    %13 = arith.addf %10, %12 : vector<8x128xf32>
    %c0_10 = arith.constant 0 : index
    %c0_11 = arith.constant 0 : index
    %14 = vector.load %arg6[%c0_10, %c0_11] : memref<128x128xf32, #tpu.memory_space<vmem>>, vector<128x128xf32>
    %cst_12 = arith.constant dense<0.000000e+00> : vector<8x128xf32>
    %15 = tpu.matmul %8, %14, %cst_12 {dimension_numbers = #tpu.dot_dimension_numbers<[1], [0], [0], [1], [0, 0, 1, 1], [], []>} : vector<8x128xf32>, vector<128x128xf32>, vector<8x128xf32> -> vector<8x128xf32>
    %c0_13 = arith.constant 0 : index
    %c0_14 = arith.constant 0 : index
    %16 = vector.load %arg7[%c0_13, %c0_14] : memref<1x128xf32, #tpu.memory_space<vmem>>, vector<1x128xf32>
    %17 = vector.broadcast %16 : vector<1x128xf32> to vector<8x128xf32>
    %18 = arith.addf %15, %17 : vector<8x128xf32>
    %cst_15 = arith.constant 5.000000e-01 : f32
    %19 = vector.broadcast %cst_15 : f32 to vector<8x128xf32>
    %20 = arith.mulf %19, %18 : vector<8x128xf32>
    %21 = math.exp %20 : vector<8x128xf32>
    %c0_16 = arith.constant 0 : index
    %c0_17 = arith.constant 0 : index
    %22 = vector.load %arg8[%c0_16, %c0_17] : memref<8x128xf32, #tpu.memory_space<vmem>>, vector<8x128xf32>
    %23 = arith.mulf %21, %22 : vector<8x128xf32>
    %24 = arith.addf %13, %23 : vector<8x128xf32>
    %25 = tpu.concatenate %24, %13, %18 in 1 : vector<8x128xf32>, vector<8x128xf32>, vector<8x128xf32> -> vector<8x384xf32>
    %c0_18 = arith.constant 0 : index
    %c0_19 = arith.constant 0 : index
    %26 = vector.load %arg9[%c0_18, %c0_19] : memref<8x384xf32, #tpu.memory_space<vmem>>, vector<8x384xf32>
    tpu.vector_store %arg9[%c0_18, %c0_19], %25 {strides = array<i32>} : memref<8x384xf32, #tpu.memory_space<vmem>>, vector<8x384xf32>,
    return
  }
  func.func @transform_0(%arg0: i32) -> (i32, i32) {
    %c0_i32 = arith.constant 0 : i32
    %c0_i32_0 = arith.constant 0 : i32
    return %arg0, %c0_i32 : i32, i32
  }
  func.func @transform_1(%arg0: i32) -> (i32, i32) {
    %c0_i32 = arith.constant 0 : i32
    %c0_i32_0 = arith.constant 0 : i32
    %c0_i32_1 = arith.constant 0 : i32
    return %c0_i32, %c0_i32_0 : i32, i32
  }
  func.func @transform_2(%arg0: i32) -> (i32, i32) {
    %c0_i32 = arith.constant 0 : i32
    %c0_i32_0 = arith.constant 0 : i32
    %c0_i32_1 = arith.constant 0 : i32
    return %c0_i32, %c0_i32_0 : i32, i32
  }
  func.func @transform_3(%arg0: i32) -> (i32, i32) {
    %c0_i32 = arith.constant 0 : i32
    %c0_i32_0 = arith.constant 0 : i32
    %c0_i32_1 = arith.constant 0 : i32
    return %c0_i32, %c0_i32_0 : i32, i32
  }
  func.func @transform_4(%arg0: i32) -> (i32, i32) {
    %c0_i32 = arith.constant 0 : i32
    %c0_i32_0 = arith.constant 0 : i32
    %c0_i32_1 = arith.constant 0 : i32
    return %c0_i32, %c0_i32_0 : i32, i32
  }
  func.func @transform_5(%arg0: i32) -> (i32, i32) {
    %c0_i32 = arith.constant 0 : i32
    %c0_i32_0 = arith.constant 0 : i32
    %c0_i32_1 = arith.constant 0 : i32
    return %c0_i32, %c0_i32_0 : i32, i32
  }
  func.func @transform_6(%arg0: i32) -> (i32, i32) {
    %c0_i32 = arith.constant 0 : i32
    %c0_i32_0 = arith.constant 0 : i32
    %c0_i32_1 = arith.constant 0 : i32
    return %c0_i32, %c0_i32_0 : i32, i32
  }
  func.func @transform_7(%arg0: i32) -> (i32, i32) {
    %c0_i32 = arith.constant 0 : i32
    %c0_i32_0 = arith.constant 0 : i32
    return %arg0, %c0_i32 : i32, i32
  }
  func.func @transform_8(%arg0: i32) -> (i32, i32) {
    %c0_i32 = arith.constant 0 : i32
    %c0_i32_0 = arith.constant 0 : i32
    return %arg0, %c0_i32 : i32, i32
  }
}

</mosaic_0001>

<llo_original>
// kernel: tpu_custom_call.1
$region0: #{tpu_custom_call.1}
  #allocation0 [shape = 'u32[]', space=smem, size = 0x4, offset = 0x4, fixed_abs, tag = 'smem constant byte address 0x4 - core index']
  #allocation1 [shape = 'u32[144,128]{1,0:T(1,128)}', space=vmem, size = 0x12000, scoped, tag = 'internal scratch']
  %s0 = inlined_call_operand.hbm [shape: f32[8,128], index: 0, kind: input, shape index: {}]
  %s1 = inlined_call_operand.hbm [shape: f32[128,256], index: 1, kind: input, shape index: {}]
  %s2 = inlined_call_operand.vmem [shape: f32[1,256], index: 2, kind: input, shape index: {}]
  %s3 = inlined_call_operand.hbm [shape: f32[128,128], index: 3, kind: input, shape index: {}]
  %s4 = inlined_call_operand.vmem [shape: f32[1,128], index: 4, kind: input, shape index: {}]
  %s5 = inlined_call_operand.hbm [shape: f32[128,128], index: 5, kind: input, shape index: {}]
  %s6 = inlined_call_operand.vmem [shape: f32[1,128], index: 6, kind: input, shape index: {}]
  %s7 = inlined_call_operand.vmem [shape: f32[8,128], index: 7, kind: input, shape index: {}]
  %s8 = inlined_call_operand.hbm [shape: f32[8,384], index: 8, kind: output, shape index: {}]
  %s9 = sld [smem:[#allocation0]]
  $region58: #{tpu_custom_call.1} parent=0
    _
  %s11 = ssub.s32 1, %s9
  %s12 = scalar_select 0, %s11, %s9
  $region1: #{tpu_custom_call.1} parent=0
    #allocation2 [shape = 'u8[4096]{0}', space=vmem, size = 0x1000, scoped, tag = 'input window, operand 0, single buffered']
    #allocation3 [shape = 's32[1]{0}', space=sflag, size = 0x4, scoped, tag = 'scoped memory for tpu_custom_call.1']
    #allocation4 [shape = 's32[1]{0}', space=sflag, size = 0x4, scoped, tag = 'scoped memory for tpu_custom_call.1']
    #allocation5 [shape = 'u8[131072]{0}', space=vmem, size = 0x20000, scoped, tag = 'input window, operand 1, single buffered']
    #allocation6 [shape = 's32[1]{0}', space=sflag, size = 0x4, scoped, tag = 'scoped memory for tpu_custom_call.1']
    #allocation7 [shape = 'u8[65536]{0}', space=vmem, size = 0x10000, scoped, tag = 'input window, operand 3, single buffered']
    #allocation8 [shape = 'u8[65536]{0}', space=vmem, size = 0x10000, scoped, tag = 'input window, operand 5, single buffered']
    #allocation9 [shape = 's32[1]{0}', space=sflag, size = 0x4, scoped, tag = 'scoped memory for tpu_custom_call.1']
    #allocation10 [shape = 'u8[12288]{0}', space=vmem, size = 0x3000, scoped, tag = 'output window, operand 0, single buffered']
    %13 = vsyncpa [#allocation3], 0
    %14 = vsyncpa [#allocation6], 0
    %15 = vsyncpa [#allocation9], 0
    %16 = vsyncpa [#allocation4], 0
    // Predicated region
    $region2: #{tpu_custom_call.1} parent=1 // pred_check
      _
    $region3: #{tpu_custom_call.1} parent=1 // pred_check_branch
      %18 = sbr.rel (0) target = $region5
    $region4: #{tpu_custom_call.1} parent=1 // pred_region
      %s20 = ssub.s32 128, 128
      %21 = vsyncadd [#allocation3], %s20
      %s23 = sshll.u32 [#allocation2], 4
      %s24 = int_to_ptr.vmem [resolvable:$true] %s23
      %26 = dma.hbm_to_vmem [thread:$0]  %s0, 128, %s24, [#allocation3]
    $region5: #{tpu_custom_call.1} parent=1 // pred_fallthru
      _
    // Predicated region
    $region6: #{tpu_custom_call.1} parent=1 // pred_check
      _
    $region7: #{tpu_custom_call.1} parent=1 // pred_check_branch
      %28 = sbr.rel (0) target = $region9
    $region8: #{tpu_custom_call.1} parent=1 // pred_region
      %s30 = ssub.s32 4096, 4096
      %31 = vsyncadd [#allocation6], %s30
      %s32 = sshll.u32 [#allocation5], 4
      %s33 = int_to_ptr.vmem [resolvable:$true] %s32
      %38 = dma.hbm_to_vmem [thread:$0]  %s1, 4096, %s33, [#allocation6], 256, 256, 16
    $region9: #{tpu_custom_call.1} parent=1 // pred_fallthru
      _
    // Predicated region
    $region10: #{tpu_custom_call.1} parent=1 // pred_check
      _
    $region11: #{tpu_custom_call.1} parent=1 // pred_check_branch
      %40 = sbr.rel (0) target = $region13
    $region12: #{tpu_custom_call.1} parent=1 // pred_region
      _
    $region13: #{tpu_custom_call.1} parent=1 // pred_fallthru
      _
    // Predicated region
    $region14: #{tpu_custom_call.1} parent=1 // pred_check
      _
    $region15: #{tpu_custom_call.1} parent=1 // pred_check_branch
      %42 = sbr.rel (0) target = $region17
    $region16: #{tpu_custom_call.1} parent=1 // pred_region
      %s44 = ssub.s32 2048, 2048
      %45 = vsyncadd [#allocation6], %s44
      %s46 = sshll.u32 [#allocation7], 4
      %s47 = int_to_ptr.vmem [resolvable:$true] %s46
      %52 = dma.hbm_to_vmem [thread:$0]  %s3, 2048, %s47, [#allocation6], 128, 128, 8
    $region17: #{tpu_custom_call.1} parent=1 // pred_fallthru
      _
    // Predicated region
    $region18: #{tpu_custom_call.1} parent=1 // pred_check
      _
    $region19: #{tpu_custom_call.1} parent=1 // pred_check_branch
      %54 = sbr.rel (0) target = $region21
    $region20: #{tpu_custom_call.1} parent=1 // pred_region
      _
    $region21: #{tpu_custom_call.1} parent=1 // pred_fallthru
      _
    // Predicated region
    $region22: #{tpu_custom_call.1} parent=1 // pred_check
      _
    $region23: #{tpu_custom_call.1} parent=1 // pred_check_branch
      %56 = sbr.rel (0) target = $region25
    $region24: #{tpu_custom_call.1} parent=1 // pred_region
      %s58 = ssub.s32 2048, 2048
      %59 = vsyncadd [#allocation9], %s58
      %s60 = sshll.u32 [#allocation8], 4
      %s61 = int_to_ptr.vmem [resolvable:$true] %s60
      %66 = dma.hbm_to_vmem [thread:$0]  %s5, 2048, %s61, [#allocation9], 128, 128, 8
    $region25: #{tpu_custom_call.1} parent=1 // pred_fallthru
      _
    // Predicated region
    $region26: #{tpu_custom_call.1} parent=1 // pred_check
      _
    $region27: #{tpu_custom_call.1} parent=1 // pred_check_branch
      %68 = sbr.rel (0) target = $region29
    $region28: #{tpu_custom_call.1} parent=1 // pred_region
      _
    $region29: #{tpu_custom_call.1} parent=1 // pred_fallthru
      _
    // Predicated region
    $region30: #{tpu_custom_call.1} parent=1 // pred_check
      _
    $region31: #{tpu_custom_call.1} parent=1 // pred_check_branch
      %70 = sbr.rel (0) target = $region33
    $region32: #{tpu_custom_call.1} parent=1 // pred_region
      _
    $region33: #{tpu_custom_call.1} parent=1 // pred_fallthru
      _
    // Predicated region
    $region34: #{tpu_custom_call.1} parent=1 // pred_check
      _
    $region35: #{tpu_custom_call.1} parent=1 // pred_check_branch
      %72 = sbr.rel (0) target = $region37
    $region36: #{tpu_custom_call.1} parent=1 // pred_region
      %73 = dma.done [#allocation3], 128
    $region37: #{tpu_custom_call.1} parent=1 // pred_fallthru
      _
    // Predicated region
    $region38: #{tpu_custom_call.1} parent=1 // pred_check
      _
    $region39: #{tpu_custom_call.1} parent=1 // pred_check_branch
      %75 = sbr.rel (0) target = $region41
    $region40: #{tpu_custom_call.1} parent=1 // pred_region
      %76 = dma.done [#allocation6], 4096
    $region41: #{tpu_custom_call.1} parent=1 // pred_fallthru
      _
    // Predicated region
    $region42: #{tpu_custom_call.1} parent=1 // pred_check
      _
    $region43: #{tpu_custom_call.1} parent=1 // pred_check_branch
      %78 = sbr.rel (0) target = $region45
    $region44: #{tpu_custom_call.1} parent=1 // pred_region
      %79 = dma.done [#allocation6], 2048
    $region45: #{tpu_custom_call.1} parent=1 // pred_fallthru
      _
    // Predicated region
    $region46: #{tpu_custom_call.1} parent=1 // pred_check
      _
    $region47: #{tpu_custom_call.1} parent=1 // pred_check_branch
      %81 = sbr.rel (0) target = $region49
    $region48: #{tpu_custom_call.1} parent=1 // pred_region
      %82 = dma.done [#allocation9], 2048
    $region49: #{tpu_custom_call.1} parent=1 // pred_fallthru
      _
    %v83 = vld [vmem:[#allocation2] sm:$0xff]
    %v84 = vld [vmem:[#allocation5] sm:$0xff]
    %v85 = vld [vmem:[#allocation5 + $0x8] sm:$0xff]
    %v86 = vld [vmem:[#allocation5 + $0x10] sm:$0xff]
    %v87 = vld [vmem:[#allocation5 + $0x18] sm:$0xff]
    %v88 = vld [vmem:[#allocation5 + $0x20] sm:$0xff]
    %v89 = vld [vmem:[#allocation5 + $0x28] sm:$0xff]
    %v90 = vld [vmem:[#allocation5 + $0x30] sm:$0xff]
    %v91 = vld [vmem:[#allocation5 + $0x38] sm:$0xff]
    %v92 = vld [vmem:[#allocation5 + $0x40] sm:$0xff]
    %v93 = vld [vmem:[#allocation5 + $0x48] sm:$0xff]
    %v94 = vld [vmem:[#allocation5 + $0x50] sm:$0xff]
    %v95 = vld [vmem:[#allocation5 + $0x58] sm:$0xff]
    %v96 = vld [vmem:[#allocation5 + $0x60] sm:$0xff]
    %v97 = vld [vmem:[#allocation5 + $0x68] sm:$0xff]
    %v98 = vld [vmem:[#allocation5 + $0x70] sm:$0xff]
    %v99 = vld [vmem:[#allocation5 + $0x78] sm:$0xff]
    %v100 = vld [vmem:[#allocation5 + $0x80] sm:$0xff]
    %v101 = vld [vmem:[#allocation5 + $0x88] sm:$0xff]
    %v102 = vld [vmem:[#allocation5 + $0x90] sm:$0xff]
    %v103 = vld [vmem:[#allocation5 + $0x98] sm:$0xff]
    %v104 = vld [vmem:[#allocation5 + $0xa0] sm:$0xff]
    %v105 = vld [vmem:[#allocation5 + $0xa8] sm:$0xff]
    %v106 = vld [vmem:[#allocation5 + $0xb0] sm:$0xff]
    %v107 = vld [vmem:[#allocation5 + $0xb8] sm:$0xff]
    %v108 = vld [vmem:[#allocation5 + $0xc0] sm:$0xff]
    %v109 = vld [vmem:[#allocation5 + $0xc8] sm:$0xff]
    %v110 = vld [vmem:[#allocation5 + $0xd0] sm:$0xff]
    %v111 = vld [vmem:[#allocation5 + $0xd8] sm:$0xff]
    %v112 = vld [vmem:[#allocation5 + $0xe0] sm:$0xff]
    %v113 = vld [vmem:[#allocation5 + $0xe8] sm:$0xff]
    %v114 = vld [vmem:[#allocation5 + $0xf0] sm:$0xff]
    %v115 = vld [vmem:[#allocation5 + $0xf8] sm:$0xff]
    %v116 = vld [vmem:[%s2] sm:$0x3]
    %v118 = vlaneseq
    %v119 = vshrl.u32 %v118, 7
    %v120 = vsub.s32 0, %v119
    %v121 = vrot.slane %v116, %v120
    %v122 = vlaneseq
    %v123 = vshrl.u32 %v122, 7
    %v124 = vsub.s32 1, %v123
    %v125 = vrot.slane %v116, %v124
    %128 = vmatprep.subr.mxu0 %v115
    %129 = vmatpush1.msra.mxu0 %v114
    %130 = vmatprep.subr.mxu0 %v113
    %131 = vmatpush1.msra.mxu0 %v112
    %132 = vmatprep.subr.mxu0 %v111
    %133 = vmatpush1.msra.mxu0 %v110
    %134 = vmatprep.subr.mxu0 %v109
    %135 = vmatpush1.msra.mxu0 %v108
    %136 = vmatprep.subr.mxu0 %v107
    %137 = vmatpush1.msra.mxu0 %v106
    %138 = vmatprep.subr.mxu0 %v105
    %139 = vmatpush1.msra.mxu0 %v104
    %140 = vmatprep.subr.mxu0 %v103
    %141 = vmatpush1.msra.mxu0 %v102
    %142 = vmatprep.subr.mxu0 %v101
    %143 = vmatpush1.msra.mxu0 %v100
    %144 = vmatprep.subr.mxu0 %v99
    %145 = vmatpush1.msra.mxu0 %v98
    %146 = vmatprep.subr.mxu0 %v97
    %147 = vmatpush1.msra.mxu0 %v96
    %148 = vmatprep.subr.mxu0 %v95
    %149 = vmatpush1.msra.mxu0 %v94
    %150 = vmatprep.subr.mxu0 %v93
    %151 = vmatpush1.msra.mxu0 %v92
    %152 = vmatprep.subr.mxu0 %v91
    %153 = vmatpush1.msra.mxu0 %v90
    %154 = vmatprep.subr.mxu0 %v89
    %155 = vmatpush1.msra.mxu0 %v88
    %156 = vmatprep.subr.mxu0 %v87
    %157 = vmatpush1.msra.mxu0 %v86
    %158 = vmatprep.subr.mxu0 %v85
    %159 = vmatpush1.msra.mxu0 %v84
    %160 = vmatprep.subr.mxu0 0.0
    %161 = vmatpush2.msra.mxu0 0.0
    %162 = vmatprep.subr.mxu0 0.0
    %163 = vmatpush2.msra.mxu0 0.0
    %164 = vmatprep.subr.mxu0 0.0
    %165 = vmatpush2.msra.mxu0 0.0
    %166 = vmatprep.subr.mxu0 0.0
    %167 = vmatpush2.msra.mxu0 0.0
    %168 = vmatprep.subr.mxu0 0.0
    %169 = vmatpush2.msra.mxu0 0.0
    %170 = vmatprep.subr.mxu0 0.0
    %171 = vmatpush2.msra.mxu0 0.0
    %172 = vmatprep.subr.mxu0 0.0
    %173 = vmatpush2.msra.mxu0 0.0
    %174 = vmatprep.subr.mxu0 0.0
    %175 = vmatpush2.msra.mxu0 0.0
    %176 = vmatprep.subr.mxu0 0.0
    %177 = vmatpush2.msra.mxu0 0.0
    %178 = vmatprep.subr.mxu0 0.0
    %179 = vmatpush2.msra.mxu0 0.0
    %180 = vmatprep.subr.mxu0 0.0
    %181 = vmatpush2.msra.mxu0 0.0
    %182 = vmatprep.subr.mxu0 0.0
    %183 = vmatpush2.msra.mxu0 0.0
    %184 = vmatprep.subr.mxu0 0.0
    %185 = vmatpush2.msra.mxu0 0.0
    %186 = vmatprep.subr.mxu0 0.0
    %187 = vmatpush2.msra.mxu0 0.0
    %188 = vmatprep.subr.mxu0 0.0
    %189 = vmatpush2.msra.mxu0 0.0
    %190 = vmatprep.subr.mxu0 0.0
    %191 = vmatpush2.msra.mxu0 0.0
    %192 = vmatprep.mubr.f32.mxu0 0.0
    %193 = vmatmul.mubr.f32.gmra.mxu0 %v83
    %v194 = vpop.f32.mrf.mxu0
    %v195 = vadd.f32 %v121, %v194
    %v196 = vpop.f32.mrf.mxu0
    %v197 = vadd.f32 %v125, %v196
    %198 = vdwg.mxu0
    %v199 = vtanh.pop %v195
    %v200 = vtanh.pop %v197
    %v201 = vld [vmem:[#allocation7] sm:$0xff]
    %v202 = vld [vmem:[#allocation7 + $0x8] sm:$0xff]
    %v203 = vld [vmem:[#allocation7 + $0x10] sm:$0xff]
    %v204 = vld [vmem:[#allocation7 + $0x18] sm:$0xff]
    %v205 = vld [vmem:[#allocation7 + $0x20] sm:$0xff]
    %v206 = vld [vmem:[#allocation7 + $0x28] sm:$0xff]
    %v207 = vld [vmem:[#allocation7 + $0x30] sm:$0xff]
    %v208 = vld [vmem:[#allocation7 + $0x38] sm:$0xff]
    %v209 = vld [vmem:[#allocation7 + $0x40] sm:$0xff]
    %v210 = vld [vmem:[#allocation7 + $0x48] sm:$0xff]
    %v211 = vld [vmem:[#allocation7 + $0x50] sm:$0xff]
    %v212 = vld [vmem:[#allocation7 + $0x58] sm:$0xff]
    %v213 = vld [vmem:[#allocation7 + $0x60] sm:$0xff]
    %v214 = vld [vmem:[#allocation7 + $0x68] sm:$0xff]
    %v215 = vld [vmem:[#allocation7 + $0x70] sm:$0xff]
    %v216 = vld [vmem:[#allocation7 + $0x78] sm:$0xff]
    %v217 = vld [vmem:[%s4] sm:$0x1]
    %v219 = vlaneseq
    %v220 = vshrl.u32 %v219, 7
    %v221 = vsub.s32 0, %v220
    %v222 = vrot.slane %v217, %v221
    %224 = vmatprep.subr.mxu0 0.0
    %225 = vmatpush1.msra.mxu0 %v216
    %226 = vmatprep.subr.mxu0 0.0
    %227 = vmatpush1.msra.mxu0 %v215
    %228 = vmatprep.subr.mxu0 0.0
    %229 = vmatpush1.msra.mxu0 %v214
    %230 = vmatprep.subr.mxu0 0.0
    %231 = vmatpush1.msra.mxu0 %v213
    %232 = vmatprep.subr.mxu0 0.0
    %233 = vmatpush1.msra.mxu0 %v212
    %234 = vmatprep.subr.mxu0 0.0
    %235 = vmatpush1.msra.mxu0 %v211
    %236 = vmatprep.subr.mxu0 0.0
    %237 = vmatpush1.msra.mxu0 %v210
    %238 = vmatprep.subr.mxu0 0.0
    %239 = vmatpush1.msra.mxu0 %v209
    %240 = vmatprep.subr.mxu0 0.0
    %241 = vmatpush1.msra.mxu0 %v208
    %242 = vmatprep.subr.mxu0 0.0
    %243 = vmatpush1.msra.mxu0 %v207
    %244 = vmatprep.subr.mxu0 0.0
    %245 = vmatpush1.msra.mxu0 %v206
    %246 = vmatprep.subr.mxu0 0.0
    %247 = vmatpush1.msra.mxu0 %v205
    %248 = vmatprep.subr.mxu0 0.0
    %249 = vmatpush1.msra.mxu0 %v204
    %250 = vmatprep.subr.mxu0 0.0
    %251 = vmatpush1.msra.mxu0 %v203
    %252 = vmatprep.subr.mxu0 0.0
    %253 = vmatpush1.msra.mxu0 %v202
    %254 = vmatprep.subr.mxu0 0.0
    %255 = vmatpush1.msra.mxu0 %v201
    %256 = vmatprep.subr.mxu0 0.0
    %257 = vmatpush2.msra.mxu0 0.0
    %258 = vmatprep.subr.mxu0 0.0
    %259 = vmatpush2.msra.mxu0 0.0
    %260 = vmatprep.subr.mxu0 0.0
    %261 = vmatpush2.msra.mxu0 0.0
    %262 = vmatprep.subr.mxu0 0.0
    %263 = vmatpush2.msra.mxu0 0.0
    %264 = vmatprep.subr.mxu0 0.0
    %265 = vmatpush2.msra.mxu0 0.0
    %266 = vmatprep.subr.mxu0 0.0
    %267 = vmatpush2.msra.mxu0 0.0
    %268 = vmatprep.subr.mxu0 0.0
    %269 = vmatpush2.msra.mxu0 0.0
    %270 = vmatprep.subr.mxu0 0.0
    %271 = vmatpush2.msra.mxu0 0.0
    %272 = vmatprep.subr.mxu0 0.0
    %273 = vmatpush2.msra.mxu0 0.0
    %274 = vmatprep.subr.mxu0 0.0
    %275 = vmatpush2.msra.mxu0 0.0
    %276 = vmatprep.subr.mxu0 0.0
    %277 = vmatpush2.msra.mxu0 0.0
    %278 = vmatprep.subr.mxu0 0.0
    %279 = vmatpush2.msra.mxu0 0.0
    %280 = vmatprep.subr.mxu0 0.0
    %281 = vmatpush2.msra.mxu0 0.0
    %282 = vmatprep.subr.mxu0 0.0
    %283 = vmatpush2.msra.mxu0 0.0
    %284 = vmatprep.subr.mxu0 0.0
    %285 = vmatpush2.msra.mxu0 0.0
    %286 = vmatprep.subr.mxu0 0.0
    %287 = vmatpush2.msra.mxu0 0.0
    %288 = vmatprep.mubr.f32.mxu0 0.0
    %289 = vmatmul.mubr.f32.gmra.mxu0 %v199
    %v290 = vpop.f32.mrf.mxu0
    %v291 = vadd.f32 %v222, %v290
    %v292 = vpop.f32.mrf.mxu0
    %293 = vdwg.mxu0
    %v294 = vld [vmem:[#allocation8] sm:$0xff]
    %v295 = vld [vmem:[#allocation8 + $0x8] sm:$0xff]
    %v296 = vld [vmem:[#allocation8 + $0x10] sm:$0xff]
    %v297 = vld [vmem:[#allocation8 + $0x18] sm:$0xff]
    %v298 = vld [vmem:[#allocation8 + $0x20] sm:$0xff]
    %v299 = vld [vmem:[#allocation8 + $0x28] sm:$0xff]
    %v300 = vld [vmem:[#allocation8 + $0x30] sm:$0xff]
    %v301 = vld [vmem:[#allocation8 + $0x38] sm:$0xff]
    %v302 = vld [vmem:[#allocation8 + $0x40] sm:$0xff]
    %v303 = vld [vmem:[#allocation8 + $0x48] sm:$0xff]
    %v304 = vld [vmem:[#allocation8 + $0x50] sm:$0xff]
    %v305 = vld [vmem:[#allocation8 + $0x58] sm:$0xff]
    %v306 = vld [vmem:[#allocation8 + $0x60] sm:$0xff]
    %v307 = vld [vmem:[#allocation8 + $0x68] sm:$0xff]
    %v308 = vld [vmem:[#allocation8 + $0x70] sm:$0xff]
    %v309 = vld [vmem:[#allocation8 + $0x78] sm:$0xff]
    %v310 = vld [vmem:[%s6] sm:$0x1]
    %v312 = vlaneseq
    %v313 = vshrl.u32 %v312, 7
    %v314 = vsub.s32 0, %v313
    %v315 = vrot.slane %v310, %v314
    %317 = vmatprep.subr.mxu0 0.0
    %318 = vmatpush1.msra.mxu0 %v309
    %319 = vmatprep.subr.mxu0 0.0
    %320 = vmatpush1.msra.mxu0 %v308
    %321 = vmatprep.subr.mxu0 0.0
    %322 = vmatpush1.msra.mxu0 %v307
    %323 = vmatprep.subr.mxu0 0.0
    %324 = vmatpush1.msra.mxu0 %v306
    %325 = vmatprep.subr.mxu0 0.0
    %326 = vmatpush1.msra.mxu0 %v305
    %327 = vmatprep.subr.mxu0 0.0
    %328 = vmatpush1.msra.mxu0 %v304
    %329 = vmatprep.subr.mxu0 0.0
    %330 = vmatpush1.msra.mxu0 %v303
    %331 = vmatprep.subr.mxu0 0.0
    %332 = vmatpush1.msra.mxu0 %v302
    %333 = vmatprep.subr.mxu0 0.0
    %334 = vmatpush1.msra.mxu0 %v301
    %335 = vmatprep.subr.mxu0 0.0
    %336 = vmatpush1.msra.mxu0 %v300
    %337 = vmatprep.subr.mxu0 0.0
    %338 = vmatpush1.msra.mxu0 %v299
    %339 = vmatprep.subr.mxu0 0.0
    %340 = vmatpush1.msra.mxu0 %v298
    %341 = vmatprep.subr.mxu0 0.0
    %342 = vmatpush1.msra.mxu0 %v297
    %343 = vmatprep.subr.mxu0 0.0
    %344 = vmatpush1.msra.mxu0 %v296
    %345 = vmatprep.subr.mxu0 0.0
    %346 = vmatpush1.msra.mxu0 %v295
    %347 = vmatprep.subr.mxu0 0.0
    %348 = vmatpush1.msra.mxu0 %v294
    %349 = vmatprep.subr.mxu0 0.0
    %350 = vmatpush2.msra.mxu0 0.0
    %351 = vmatprep.subr.mxu0 0.0
    %352 = vmatpush2.msra.mxu0 0.0
    %353 = vmatprep.subr.mxu0 0.0
    %354 = vmatpush2.msra.mxu0 0.0
    %355 = vmatprep.subr.mxu0 0.0
    %356 = vmatpush2.msra.mxu0 0.0
    %357 = vmatprep.subr.mxu0 0.0
    %358 = vmatpush2.msra.mxu0 0.0
    %359 = vmatprep.subr.mxu0 0.0
    %360 = vmatpush2.msra.mxu0 0.0
    %361 = vmatprep.subr.mxu0 0.0
    %362 = vmatpush2.msra.mxu0 0.0
    %363 = vmatprep.subr.mxu0 0.0
    %364 = vmatpush2.msra.mxu0 0.0
    %365 = vmatprep.subr.mxu0 0.0
    %366 = vmatpush2.msra.mxu0 0.0
    %367 = vmatprep.subr.mxu0 0.0
    %368 = vmatpush2.msra.mxu0 0.0
    %369 = vmatprep.subr.mxu0 0.0
    %370 = vmatpush2.msra.mxu0 0.0
    %371 = vmatprep.subr.mxu0 0.0
    %372 = vmatpush2.msra.mxu0 0.0
    %373 = vmatprep.subr.mxu0 0.0
    %374 = vmatpush2.msra.mxu0 0.0
    %375 = vmatprep.subr.mxu0 0.0
    %376 = vmatpush2.msra.mxu0 0.0
    %377 = vmatprep.subr.mxu0 0.0
    %378 = vmatpush2.msra.mxu0 0.0
    %379 = vmatprep.subr.mxu0 0.0
    %380 = vmatpush2.msra.mxu0 0.0
    %381 = vmatprep.mubr.f32.mxu0 0.0
    %382 = vmatmul.mubr.f32.gmra.mxu0 %v200
    %v383 = vpop.f32.mrf.mxu0
    %v384 = vadd.f32 %v315, %v383
    %v385 = vpop.f32.mrf.mxu0
    %386 = vdwg.mxu0
    %v387 = vmul.f32 %v384, 0.5
    %v388 = vmul.f32 %v387, 1.442695
    %v389 = vpow.pop %v388
    %v390 = vld [vmem:[%s7] sm:$0xff]
    %v391 = vmul.f32 %v389, %v390
    %v392 = vadd.f32 %v291, %v391
    %393 = vst [vmem:[#allocation10] sm:$0xff] %v392
    %394 = vst [vmem:[#allocation10 + $0x8] sm:$0xff] %v291
    %395 = vst [vmem:[#allocation10 + $0x10] sm:$0xff] %v384
    // Predicated region
    $region50: #{tpu_custom_call.1} parent=1 // pred_check
      _
    $region51: #{tpu_custom_call.1} parent=1 // pred_check_branch
      %397 = sbr.rel (0) target = $region53
    $region52: #{tpu_custom_call.1} parent=1 // pred_region
      %s399 = ssub.s32 384, 384
      %400 = vsyncadd [#allocation4], %s399
      %s402 = sshll.u32 [#allocation10], 4
      %s403 = int_to_ptr.vmem [resolvable:$true] %s402
      %405 = dma.vmem_to_hbm [thread:$0]  %s403, 384, %s8, [#allocation4]
    $region53: #{tpu_custom_call.1} parent=1 // pred_fallthru
      _
    // Predicated region
    $region54: #{tpu_custom_call.1} parent=1 // pred_check
      _
    $region55: #{tpu_custom_call.1} parent=1 // pred_check_branch
      %407 = sbr.rel (0) target = $region57
    $region56: #{tpu_custom_call.1} parent=1 // pred_region
      %408 = dma.done [#allocation4], 384
    $region57: #{tpu_custom_call.1} parent=1 // pred_fallthru
      _
    %409 = vsyncpa [#allocation3], 1
    %410 = vsyncpa [#allocation6], 1
    %411 = vsyncpa [#allocation9], 1
    %412 = vsyncpa [#allocation4], 1

// kernel: tpu_custom_call.1
$region0: #{tpu_custom_call.1}
  #allocation0 [shape = 'u32[]', space=smem, size = 0x4, offset = 0x4, fixed_abs, tag = 'smem constant byte address 0x4 - core index']
  #allocation1 [shape = 'u32[144,128]{1,0:T(1,128)}', space=vmem, size = 0x12000, scoped, tag = 'internal scratch']
  %s0 = inlined_call_operand.hbm [shape: f32[8,128], index: 0, kind: input, shape index: {}]
  %s1 = inlined_call_operand.hbm [shape: f32[128,256], index: 1, kind: input, shape index: {}]
  %s2 = inlined_call_operand.vmem [shape: f32[1,256], index: 2, kind: input, shape index: {}]
  %s3 = inlined_call_operand.hbm [shape: f32[128,128], index: 3, kind: input, shape index: {}]
  %s4 = inlined_call_operand.vmem [shape: f32[1,128], index: 4, kind: input, shape index: {}]
  %s5 = inlined_call_operand.hbm [shape: f32[128,128], index: 5, kind: input, shape index: {}]
  %s6 = inlined_call_operand.vmem [shape: f32[1,128], index: 6, kind: input, shape index: {}]
  %s7 = inlined_call_operand.vmem [shape: f32[8,128], index: 7, kind: input, shape index: {}]
  %s8 = inlined_call_operand.hbm [shape: f32[8,384], index: 8, kind: output, shape index: {}]
  %s9 = sld [smem:[#allocation0]]
  $region58: #{tpu_custom_call.1} parent=0
    _
  %s11 = ssub.s32 1, %s9
  %s12 = scalar_select 0, %s11, %s9
  $region1: #{tpu_custom_call.1} parent=0
    #allocation2 [shape = 'u8[4096]{0}', space=vmem, size = 0x1000, scoped, tag = 'input window, operand 0, single buffered']
    #allocation3 [shape = 's32[1]{0}', space=sflag, size = 0x4, scoped, tag = 'scoped memory for tpu_custom_call.1']
    #allocation4 [shape = 's32[1]{0}', space=sflag, size = 0x4, scoped, tag = 'scoped memory for tpu_custom_call.1']
    #allocation5 [shape = 'u8[131072]{0}', space=vmem, size = 0x20000, scoped, tag = 'input window, operand 1, single buffered']
    #allocation6 [shape = 's32[1]{0}', space=sflag, size = 0x4, scoped, tag = 'scoped memory for tpu_custom_call.1']
    #allocation7 [shape = 'u8[65536]{0}', space=vmem, size = 0x10000, scoped, tag = 'input window, operand 3, single buffered']
    #allocation8 [shape = 'u8[65536]{0}', space=vmem, size = 0x10000, scoped, tag = 'input window, operand 5, single buffered']
    #allocation9 [shape = 's32[1]{0}', space=sflag, size = 0x4, scoped, tag = 'scoped memory for tpu_custom_call.1']
    #allocation10 [shape = 'u8[12288]{0}', space=vmem, size = 0x3000, scoped, tag = 'output window, operand 0, single buffered']
    %13 = vsyncpa [#allocation3], 0
    %14 = vsyncpa [#allocation6], 0
    %15 = vsyncpa [#allocation9], 0
    %16 = vsyncpa [#allocation4], 0
    // Predicated region
    $region2: #{tpu_custom_call.1} parent=1 // pred_check
      _
    $region3: #{tpu_custom_call.1} parent=1 // pred_check_branch
      %18 = sbr.rel (0) target = $region5
    $region4: #{tpu_custom_call.1} parent=1 // pred_region
      %s20 = ssub.s32 128, 128
      %21 = vsyncadd [#allocation3], %s20
      %s23 = sshll.u32 [#allocation2], 4
      %s24 = int_to_ptr.vmem [resolvable:$true] %s23
      %26 = dma.hbm_to_vmem [thread:$0]  %s0, 128, %s24, [#allocation3]
    $region5: #{tpu_custom_call.1} parent=1 // pred_fallthru
      _
    // Predicated region
    $region6: #{tpu_custom_call.1} parent=1 // pred_check
      _
    $region7: #{tpu_custom_call.1} parent=1 // pred_check_branch
      %28 = sbr.rel (0) target = $region9
    $region8: #{tpu_custom_call.1} parent=1 // pred_region
      %s30 = ssub.s32 4096, 4096
      %31 = vsyncadd [#allocation6], %s30
      %s32 = sshll.u32 [#allocation5], 4
      %s33 = int_to_ptr.vmem [resolvable:$true] %s32
      %38 = dma.hbm_to_vmem [thread:$0]  %s1, 4096, %s33, [#allocation6], 256, 256, 16
    $region9: #{tpu_custom_call.1} parent=1 // pred_fallthru
      _
    // Predicated region
    $region10: #{tpu_custom_call.1} parent=1 // pred_check
      _
    $region11: #{tpu_custom_call.1} parent=1 // pred_check_branch
      %40 = sbr.rel (0) target = $region13
    $region12: #{tpu_custom_call.1} parent=1 // pred_region
      _
    $region13: #{tpu_custom_call.1} parent=1 // pred_fallthru
      _
    // Predicated region
    $region14: #{tpu_custom_call.1} parent=1 // pred_check
      _
    $region15: #{tpu_custom_call.1} parent=1 // pred_check_branch
      %42 = sbr.rel (0) target = $region17
    $region16: #{tpu_custom_call.1} parent=1 // pred_region
      %s44 = ssub.s32 2048, 2048
      %45 = vsyncadd [#allocation6], %s44
      %s46 = sshll.u32 [#allocation7], 4
      %s47 = int_to_ptr.vmem [resolvable:$true] %s46
      %52 = dma.hbm_to_vmem [thread:$0]  %s3, 2048, %s47, [#allocation6], 128, 128, 8
    $region17: #{tpu_custom_call.1} parent=1 // pred_fallthru
      _
    // Predicated region
    $region18: #{tpu_custom_call.1} parent=1 // pred_check
      _
    $region19: #{tpu_custom_call.1} parent=1 // pred_check_branch
      %54 = sbr.rel (0) target = $region21
    $region20: #{tpu_custom_call.1} parent=1 // pred_region
      _
    $region21: #{tpu_custom_call.1} parent=1 // pred_fallthru
      _
    // Predicated region
    $region22: #{tpu_custom_call.1} parent=1 // pred_check
      _
    $region23: #{tpu_custom_call.1} parent=1 // pred_check_branch
      %56 = sbr.rel (0) target = $region25
    $region24: #{tpu_custom_call.1} parent=1 // pred_region
      %s58 = ssub.s32 2048, 2048
      %59 = vsyncadd [#allocation9], %s58
      %s60 = sshll.u32 [#allocation8], 4
      %s61 = int_to_ptr.vmem [resolvable:$true] %s60
      %66 = dma.hbm_to_vmem [thread:$0]  %s5, 2048, %s61, [#allocation9], 128, 128, 8
    $region25: #{tpu_custom_call.1} parent=1 // pred_fallthru
      _
    // Predicated region
    $region26: #{tpu_custom_call.1} parent=1 // pred_check
      _
    $region27: #{tpu_custom_call.1} parent=1 // pred_check_branch
      %68 = sbr.rel (0) target = $region29
    $region28: #{tpu_custom_call.1} parent=1 // pred_region
      _
    $region29: #{tpu_custom_call.1} parent=1 // pred_fallthru
      _
    // Predicated region
    $region30: #{tpu_custom_call.1} parent=1 // pred_check
      _
    $region31: #{tpu_custom_call.1} parent=1 // pred_check_branch
      %70 = sbr.rel (0) target = $region33
    $region32: #{tpu_custom_call.1} parent=1 // pred_region
      _
    $region33: #{tpu_custom_call.1} parent=1 // pred_fallthru
      _
    // Predicated region
    $region34: #{tpu_custom_call.1} parent=1 // pred_check
      _
    $region35: #{tpu_custom_call.1} parent=1 // pred_check_branch
      %72 = sbr.rel (0) target = $region37
    $region36: #{tpu_custom_call.1} parent=1 // pred_region
      %73 = dma.done [#allocation3], 128
    $region37: #{tpu_custom_call.1} parent=1 // pred_fallthru
      _
    // Predicated region
    $region38: #{tpu_custom_call.1} parent=1 // pred_check
      _
    $region39: #{tpu_custom_call.1} parent=1 // pred_check_branch
      %75 = sbr.rel (0) target = $region41
    $region40: #{tpu_custom_call.1} parent=1 // pred_region
      %76 = dma.done [#allocation6], 4096
    $region41: #{tpu_custom_call.1} parent=1 // pred_fallthru
      _
    // Predicated region
    $region42: #{tpu_custom_call.1} parent=1 // pred_check
      _
    $region43: #{tpu_custom_call.1} parent=1 // pred_check_branch
      %78 = sbr.rel (0) target = $region45
    $region44: #{tpu_custom_call.1} parent=1 // pred_region
      %79 = dma.done [#allocation6], 2048
    $region45: #{tpu_custom_call.1} parent=1 // pred_fallthru
      _
    // Predicated region
    $region46: #{tpu_custom_call.1} parent=1 // pred_check
      _
    $region47: #{tpu_custom_call.1} parent=1 // pred_check_branch
      %81 = sbr.rel (0) target = $region49
    $region48: #{tpu_custom_call.1} parent=1 // pred_region
      %82 = dma.done [#allocation9], 2048
    $region49: #{tpu_custom_call.1} parent=1 // pred_fallthru
      _
    %v83 = vld [vmem:[#allocation2] sm:$0xff]
    %v84 = vld [vmem:[#allocation5] sm:$0xff]
    %v85 = vld [vmem:[#allocation5 + $0x8] sm:$0xff]
    %v86 = vld [vmem:[#allocation5 + $0x10] sm:$0xff]
    %v87 = vld [vmem:[#allocation5 + $0x18] sm:$0xff]
    %v88 = vld [vmem:[#allocation5 + $0x20] sm:$0xff]
    %v89 = vld [vmem:[#allocation5 + $0x28] sm:$0xff]
    %v90 = vld [vmem:[#allocation5 + $0x30] sm:$0xff]
    %v91 = vld [vmem:[#allocation5 + $0x38] sm:$0xff]
    %v92 = vld [vmem:[#allocation5 + $0x40] sm:$0xff]
    %v93 = vld [vmem:[#allocation5 + $0x48] sm:$0xff]
    %v94 = vld [vmem:[#allocation5 + $0x50] sm:$0xff]
    %v95 = vld [vmem:[#allocation5 + $0x58] sm:$0xff]
    %v96 = vld [vmem:[#allocation5 + $0x60] sm:$0xff]
    %v97 = vld [vmem:[#allocation5 + $0x68] sm:$0xff]
    %v98 = vld [vmem:[#allocation5 + $0x70] sm:$0xff]
    %v99 = vld [vmem:[#allocation5 + $0x78] sm:$0xff]
    %v100 = vld [vmem:[#allocation5 + $0x80] sm:$0xff]
    %v101 = vld [vmem:[#allocation5 + $0x88] sm:$0xff]
    %v102 = vld [vmem:[#allocation5 + $0x90] sm:$0xff]
    %v103 = vld [vmem:[#allocation5 + $0x98] sm:$0xff]
    %v104 = vld [vmem:[#allocation5 + $0xa0] sm:$0xff]
    %v105 = vld [vmem:[#allocation5 + $0xa8] sm:$0xff]
    %v106 = vld [vmem:[#allocation5 + $0xb0] sm:$0xff]
    %v107 = vld [vmem:[#allocation5 + $0xb8] sm:$0xff]
    %v108 = vld [vmem:[#allocation5 + $0xc0] sm:$0xff]
    %v109 = vld [vmem:[#allocation5 + $0xc8] sm:$0xff]
    %v110 = vld [vmem:[#allocation5 + $0xd0] sm:$0xff]
    %v111 = vld [vmem:[#allocation5 + $0xd8] sm:$0xff]
    %v112 = vld [vmem:[#allocation5 + $0xe0] sm:$0xff]
    %v113 = vld [vmem:[#allocation5 + $0xe8] sm:$0xff]
    %v114 = vld [vmem:[#allocation5 + $0xf0] sm:$0xff]
    %v115 = vld [vmem:[#allocation5 + $0xf8] sm:$0xff]
    %v116 = vld [vmem:[%s2] sm:$0x3]
    %v118 = vlaneseq
    %v119 = vshrl.u32 %v118, 7
    %v120 = vsub.s32 0, %v119
    %v121 = vrot.slane %v116, %v120
    %v122 = vlaneseq
    %v123 = vshrl.u32 %v122, 7
    %v124 = vsub.s32 1, %v123
    %v125 = vrot.slane %v116, %v124
    %128 = vmatprep.subr.mxu0 %v115
    %129 = vmatpush1.msra.mxu0 %v114
    %130 = vmatprep.subr.mxu0 %v113
    %131 = vmatpush1.msra.mxu0 %v112
    %132 = vmatprep.subr.mxu0 %v111
    %133 = vmatpush1.msra.mxu0 %v110
    %134 = vmatprep.subr.mxu0 %v109
    %135 = vmatpush1.msra.mxu0 %v108
    %136 = vmatprep.subr.mxu0 %v107
    %137 = vmatpush1.msra.mxu0 %v106
    %138 = vmatprep.subr.mxu0 %v105
    %139 = vmatpush1.msra.mxu0 %v104
    %140 = vmatprep.subr.mxu0 %v103
    %141 = vmatpush1.msra.mxu0 %v102
    %142 = vmatprep.subr.mxu0 %v101
    %143 = vmatpush1.msra.mxu0 %v100
    %144 = vmatprep.subr.mxu0 %v99
    %145 = vmatpush1.msra.mxu0 %v98
    %146 = vmatprep.subr.mxu0 %v97
    %147 = vmatpush1.msra.mxu0 %v96
    %148 = vmatprep.subr.mxu0 %v95
    %149 = vmatpush1.msra.mxu0 %v94
    %150 = vmatprep.subr.mxu0 %v93
    %151 = vmatpush1.msra.mxu0 %v92
    %152 = vmatprep.subr.mxu0 %v91
    %153 = vmatpush1.msra.mxu0 %v90
    %154 = vmatprep.subr.mxu0 %v89
    %155 = vmatpush1.msra.mxu0 %v88
    %156 = vmatprep.subr.mxu0 %v87
    %157 = vmatpush1.msra.mxu0 %v86
    %158 = vmatprep.subr.mxu0 %v85
    %159 = vmatpush1.msra.mxu0 %v84
    %160 = vmatprep.subr.mxu0 0.0
    %161 = vmatpush2.msra.mxu0 0.0
    %162 = vmatprep.subr.mxu0 0.0
    %163 = vmatpush2.msra.mxu0 0.0
    %164 = vmatprep.subr.mxu0 0.0
    %165 = vmatpush2.msra.mxu0 0.0
    %166 = vmatprep.subr.mxu0 0.0
    %167 = vmatpush2.msra.mxu0 0.0
    %168 = vmatprep.subr.mxu0 0.0
    %169 = vmatpush2.msra.mxu0 0.0
    %170 = vmatprep.subr.mxu0 0.0
    %171 = vmatpush2.msra.mxu0 0.0
    %172 = vmatprep.subr.mxu0 0.0
    %173 = vmatpush2.msra.mxu0 0.0
    %174 = vmatprep.subr.mxu0 0.0
    %175 = vmatpush2.msra.mxu0 0.0
    %176 = vmatprep.subr.mxu0 0.0
    %177 = vmatpush2.msra.mxu0 0.0
    %178 = vmatprep.subr.mxu0 0.0
    %179 = vmatpush2.msra.mxu0 0.0
    %180 = vmatprep.subr.mxu0 0.0
    %181 = vmatpush2.msra.mxu0 0.0
    %182 = vmatprep.subr.mxu0 0.0
    %183 = vmatpush2.msra.mxu0 0.0
    %184 = vmatprep.subr.mxu0 0.0
    %185 = vmatpush2.msra.mxu0 0.0
    %186 = vmatprep.subr.mxu0 0.0
    %187 = vmatpush2.msra.mxu0 0.0
    %188 = vmatprep.subr.mxu0 0.0
    %189 = vmatpush2.msra.mxu0 0.0
    %190 = vmatprep.subr.mxu0 0.0
    %191 = vmatpush2.msra.mxu0 0.0
    %192 = vmatprep.mubr.f32.mxu0 0.0
    %193 = vmatmul.mubr.f32.gmra.mxu0 %v83
    %v194 = vpop.f32.mrf.mxu0
    %v195 = vadd.f32 %v121, %v194
    %v196 = vpop.f32.mrf.mxu0
    %v197 = vadd.f32 %v125, %v196
    %198 = vdwg.mxu0
    %v199 = vtanh.pop %v195
    %v200 = vtanh.pop %v197
    %v201 = vld [vmem:[#allocation7] sm:$0xff]
    %v202 = vld [vmem:[#allocation7 + $0x8] sm:$0xff]
    %v203 = vld [vmem:[#allocation7 + $0x10] sm:$0xff]
    %v204 = vld [vmem:[#allocation7 + $0x18] sm:$0xff]
    %v205 = vld [vmem:[#allocation7 + $0x20] sm:$0xff]
    %v206 = vld [vmem:[#allocation7 + $0x28] sm:$0xff]
    %v207 = vld [vmem:[#allocation7 + $0x30] sm:$0xff]
    %v208 = vld [vmem:[#allocation7 + $0x38] sm:$0xff]
    %v209 = vld [vmem:[#allocation7 + $0x40] sm:$0xff]
    %v210 = vld [vmem:[#allocation7 + $0x48] sm:$0xff]
    %v211 = vld [vmem:[#allocation7 + $0x50] sm:$0xff]
    %v212 = vld [vmem:[#allocation7 + $0x58] sm:$0xff]
    %v213 = vld [vmem:[#allocation7 + $0x60] sm:$0xff]
    %v214 = vld [vmem:[#allocation7 + $0x68] sm:$0xff]
    %v215 = vld [vmem:[#allocation7 + $0x70] sm:$0xff]
    %v216 = vld [vmem:[#allocation7 + $0x78] sm:$0xff]
    %v217 = vld [vmem:[%s4] sm:$0x1]
    %v219 = vlaneseq
    %v220 = vshrl.u32 %v219, 7
    %v221 = vsub.s32 0, %v220
    %v222 = vrot.slane %v217, %v221
    %224 = vmatprep.subr.mxu0 0.0
    %225 = vmatpush1.msra.mxu0 %v216
    %226 = vmatprep.subr.mxu0 0.0
    %227 = vmatpush1.msra.mxu0 %v215
    %228 = vmatprep.subr.mxu0 0.0
    %229 = vmatpush1.msra.mxu0 %v214
    %230 = vmatprep.subr.mxu0 0.0
    %231 = vmatpush1.msra.mxu0 %v213
    %232 = vmatprep.subr.mxu0 0.0
    %233 = vmatpush1.msra.mxu0 %v212
    %234 = vmatprep.subr.mxu0 0.0
    %235 = vmatpush1.msra.mxu0 %v211
    %236 = vmatprep.subr.mxu0 0.0
    %237 = vmatpush1.msra.mxu0 %v210
    %238 = vmatprep.subr.mxu0 0.0
    %239 = vmatpush1.msra.mxu0 %v209
    %240 = vmatprep.subr.mxu0 0.0
    %241 = vmatpush1.msra.mxu0 %v208
    %242 = vmatprep.subr.mxu0 0.0
    %243 = vmatpush1.msra.mxu0 %v207
    %244 = vmatprep.subr.mxu0 0.0
    %245 = vmatpush1.msra.mxu0 %v206
    %246 = vmatprep.subr.mxu0 0.0
    %247 = vmatpush1.msra.mxu0 %v205
    %248 = vmatprep.subr.mxu0 0.0
    %249 = vmatpush1.msra.mxu0 %v204
    %250 = vmatprep.subr.mxu0 0.0
    %251 = vmatpush1.msra.mxu0 %v203
    %252 = vmatprep.subr.mxu0 0.0
    %253 = vmatpush1.msra.mxu0 %v202
    %254 = vmatprep.subr.mxu0 0.0
    %255 = vmatpush1.msra.mxu0 %v201
    %256 = vmatprep.subr.mxu0 0.0
    %257 = vmatpush2.msra.mxu0 0.0
    %258 = vmatprep.subr.mxu0 0.0
    %259 = vmatpush2.msra.mxu0 0.0
    %260 = vmatprep.subr.mxu0 0.0
    %261 = vmatpush2.msra.mxu0 0.0
    %262 = vmatprep.subr.mxu0 0.0
    %263 = vmatpush2.msra.mxu0 0.0
    %264 = vmatprep.subr.mxu0 0.0
    %265 = vmatpush2.msra.mxu0 0.0
    %266 = vmatprep.subr.mxu0 0.0
    %267 = vmatpush2.msra.mxu0 0.0
    %268 = vmatprep.subr.mxu0 0.0
    %269 = vmatpush2.msra.mxu0 0.0
    %270 = vmatprep.subr.mxu0 0.0
    %271 = vmatpush2.msra.mxu0 0.0
    %272 = vmatprep.subr.mxu0 0.0
    %273 = vmatpush2.msra.mxu0 0.0
    %274 = vmatprep.subr.mxu0 0.0
    %275 = vmatpush2.msra.mxu0 0.0
    %276 = vmatprep.subr.mxu0 0.0
    %277 = vmatpush2.msra.mxu0 0.0
    %278 = vmatprep.subr.mxu0 0.0
    %279 = vmatpush2.msra.mxu0 0.0
    %280 = vmatprep.subr.mxu0 0.0
    %281 = vmatpush2.msra.mxu0 0.0
    %282 = vmatprep.subr.mxu0 0.0
    %283 = vmatpush2.msra.mxu0 0.0
    %284 = vmatprep.subr.mxu0 0.0
    %285 = vmatpush2.msra.mxu0 0.0
    %286 = vmatprep.subr.mxu0 0.0
    %287 = vmatpush2.msra.mxu0 0.0
    %288 = vmatprep.mubr.f32.mxu0 0.0
    %289 = vmatmul.mubr.f32.gmra.mxu0 %v199
    %v290 = vpop.f32.mrf.mxu0
    %v291 = vadd.f32 %v222, %v290
    %v292 = vpop.f32.mrf.mxu0
    %293 = vdwg.mxu0
    %v294 = vld [vmem:[#allocation8] sm:$0xff]
    %v295 = vld [vmem:[#allocation8 + $0x8] sm:$0xff]
    %v296 = vld [vmem:[#allocation8 + $0x10] sm:$0xff]
    %v297 = vld [vmem:[#allocation8 + $0x18] sm:$0xff]
    %v298 = vld [vmem:[#allocation8 + $0x20] sm:$0xff]
    %v299 = vld [vmem:[#allocation8 + $0x28] sm:$0xff]
    %v300 = vld [vmem:[#allocation8 + $0x30] sm:$0xff]
    %v301 = vld [vmem:[#allocation8 + $0x38] sm:$0xff]
    %v302 = vld [vmem:[#allocation8 + $0x40] sm:$0xff]
    %v303 = vld [vmem:[#allocation8 + $0x48] sm:$0xff]
    %v304 = vld [vmem:[#allocation8 + $0x50] sm:$0xff]
    %v305 = vld [vmem:[#allocation8 + $0x58] sm:$0xff]
    %v306 = vld [vmem:[#allocation8 + $0x60] sm:$0xff]
    %v307 = vld [vmem:[#allocation8 + $0x68] sm:$0xff]
    %v308 = vld [vmem:[#allocation8 + $0x70] sm:$0xff]
    %v309 = vld [vmem:[#allocation8 + $0x78] sm:$0xff]
    %v310 = vld [vmem:[%s6] sm:$0x1]
    %v312 = vlaneseq
    %v313 = vshrl.u32 %v312, 7
    %v314 = vsub.s32 0, %v313
    %v315 = vrot.slane %v310, %v314
    %317 = vmatprep.subr.mxu0 0.0
    %318 = vmatpush1.msra.mxu0 %v309
    %319 = vmatprep.subr.mxu0 0.0
    %320 = vmatpush1.msra.mxu0 %v308
    %321 = vmatprep.subr.mxu0 0.0
    %322 = vmatpush1.msra.mxu0 %v307
    %323 = vmatprep.subr.mxu0 0.0
    %324 = vmatpush1.msra.mxu0 %v306
    %325 = vmatprep.subr.mxu0 0.0
    %326 = vmatpush1.msra.mxu0 %v305
    %327 = vmatprep.subr.mxu0 0.0
    %328 = vmatpush1.msra.mxu0 %v304
    %329 = vmatprep.subr.mxu0 0.0
    %330 = vmatpush1.msra.mxu0 %v303
    %331 = vmatprep.subr.mxu0 0.0
    %332 = vmatpush1.msra.mxu0 %v302
    %333 = vmatprep.subr.mxu0 0.0
    %334 = vmatpush1.msra.mxu0 %v301
    %335 = vmatprep.subr.mxu0 0.0
    %336 = vmatpush1.msra.mxu0 %v300
    %337 = vmatprep.subr.mxu0 0.0
    %338 = vmatpush1.msra.mxu0 %v299
    %339 = vmatprep.subr.mxu0 0.0
    %340 = vmatpush1.msra.mxu0 %v298
    %341 = vmatprep.subr.mxu0 0.0
    %342 = vmatpush1.msra.mxu0 %v297
    %343 = vmatprep.subr.mxu0 0.0
    %344 = vmatpush1.msra.mxu0 %v296
    %345 = vmatprep.subr.mxu0 0.0
    %346 = vmatpush1.msra.mxu0 %v295
    %347 = vmatprep.subr.mxu0 0.0
    %348 = vmatpush1.msra.mxu0 %v294
    %349 = vmatprep.subr.mxu0 0.0
    %350 = vmatpush2.msra.mxu0 0.0
    %351 = vmatprep.subr.mxu0 0.0
    %352 = vmatpush2.msra.mxu0 0.0
    %353 = vmatprep.subr.mxu0 0.0
    %354 = vmatpush2.msra.mxu0 0.0
    %355 = vmatprep.subr.mxu0 0.0
    %356 = vmatpush2.msra.mxu0 0.0
    %357 = vmatprep.subr.mxu0 0.0
    %358 = vmatpush2.msra.mxu0 0.0
    %359 = vmatprep.subr.mxu0 0.0
    %360 = vmatpush2.msra.mxu0 0.0
    %361 = vmatprep.subr.mxu0 0.0
    %362 = vmatpush2.msra.mxu0 0.0
    %363 = vmatprep.subr.mxu0 0.0
    %364 = vmatpush2.msra.mxu0 0.0
    %365 = vmatprep.subr.mxu0 0.0
    %366 = vmatpush2.msra.mxu0 0.0
    %367 = vmatprep.subr.mxu0 0.0
    %368 = vmatpush2.msra.mxu0 0.0
    %369 = vmatprep.subr.mxu0 0.0
    %370 = vmatpush2.msra.mxu0 0.0
    %371 = vmatprep.subr.mxu0 0.0
    %372 = vmatpush2.msra.mxu0 0.0
    %373 = vmatprep.subr.mxu0 0.0
    %374 = vmatpush2.msra.mxu0 0.0
    %375 = vmatprep.subr.mxu0 0.0
    %376 = vmatpush2.msra.mxu0 0.0
    %377 = vmatprep.subr.mxu0 0.0
    %378 = vmatpush2.msra.mxu0 0.0
    %379 = vmatprep.subr.mxu0 0.0
    %380 = vmatpush2.msra.mxu0 0.0
    %381 = vmatprep.mubr.f32.mxu0 0.0
    %382 = vmatmul.mubr.f32.gmra.mxu0 %v200
    %v383 = vpop.f32.mrf.mxu0
    %v384 = vadd.f32 %v315, %v383
    %v385 = vpop.f32.mrf.mxu0
    %386 = vdwg.mxu0
    %v387 = vmul.f32 %v384, 0.5
    %v388 = vmul.f32 %v387, 1.442695
    %v389 = vpow.pop %v388
    %v390 = vld [vmem:[%s7] sm:$0xff]
    %v391 = vmul.f32 %v389, %v390
    %v392 = vadd.f32 %v291, %v391
    %393 = vst [vmem:[#allocation10] sm:$0xff] %v392
    %394 = vst [vmem:[#allocation10 + $0x8] sm:$0xff] %v291
    %395 = vst [vmem:[#allocation10 + $0x10] sm:$0xff] %v384
    // Predicated region
    $region50: #{tpu_custom_call.1} parent=1 // pred_check
      _
    $region51: #{tpu_custom_call.1} parent=1 // pred_check_branch
      %397 = sbr.rel (0) target = $region53
    $region52: #{tpu_custom_call.1} parent=1 // pred_region
      %s399 = ssub.s32 384, 384
      %400 = vsyncadd [#allocation4], %s399
      %s402 = sshll.u32 [#allocation10], 4
      %s403 = int_to_ptr.vmem [resolvable:$true] %s402
      %405 = dma.vmem_to_hbm [thread:$0]  %s403, 384, %s8, [#allocation4]
    $region53: #{tpu_custom_call.1} parent=1 // pred_fallthru
      _
    // Predicated region
    $region54: #{tpu_custom_call.1} parent=1 // pred_check
      _
    $region55: #{tpu_custom_call.1} parent=1 // pred_check_branch
      %407 = sbr.rel (0) target = $region57
    $region56: #{tpu_custom_call.1} parent=1 // pred_region
      %408 = dma.done [#allocation4], 384
    $region57: #{tpu_custom_call.1} parent=1 // pred_fallthru
      _
    %409 = vsyncpa [#allocation3], 1
    %410 = vsyncpa [#allocation6], 1
    %411 = vsyncpa [#allocation9], 1
    %412 = vsyncpa [#allocation4], 1

</llo_original>
